<compile_context>
chip_gen: v7x
topology: tpu7x:2x2x1
jax: 0.10.0
libtpu: 0.0.40
codegen_flags: <defaults>
</compile_context>

<pallas_src>
import functools

import jax
import jax.numpy as jnp
from jax.experimental import pallas as pl
from jax.experimental.pallas import tpu as pltpu

BERT_DIM = 768
LANE = 128
SUBLANE = 8
LN_EPS = 1e-5

TB_MAX = 2048                      # target batch-tile rows (amortizes ~0.35us/step)
VMEM_BUDGET_BYTES = 20 * 1024 * 1024   # keep live tiles well under the 32 MiB scoped limit
VMEM_LIMIT_BYTES = 32 * 1024 * 1024    # explicit scoped-VMEM limit (safe on v5e/v6e/v7x)


def _round_up(x, m):
    return (x + m - 1) // m * m


def _head_kernel(x_ref, w1_ref, b1_ref, w2_ref, b2_ref, g_ref, beta_ref, o_ref,
                 *, nout, eps):
    """Fused: relu(x @ W1 + b1) @ W2 + b2, then LayerNorm over the true nout cols."""
    x = x_ref[...]                                            # (tb, 768) bf16

    # linear1 + relu (bf16 x bf16 -> f32 on the MXU), cast straight back to bf16
    # so the live h tile feeding the second matmul is half-width.
    h = jnp.dot(x, w1_ref[...], preferred_element_type=jnp.float32)
    h = jnp.maximum(h + b1_ref[...], 0.0).astype(jnp.bfloat16)

    # dropout(p=0.1): identity in eval mode
    # TODO(synk): training-mode dropout would use pltpu.prng_seed/prng_random_bits

    # linear2 (f32 accumulation, elementwise path stays f32 -- safe on v5e too)
    y = jnp.dot(h, w2_ref[...], preferred_element_type=jnp.float32) + b2_ref[...]

    # LayerNorm over the real nout columns (lane padding masked out of the stats)
    nout_pad = y.shape[-1]
    if nout == nout_pad:
        ym = y
    else:
        col = jax.lax.broadcasted_iota(jnp.int32, (1, nout_pad), 1)
        ym = jnp.where(col < nout, y, 0.0)
    inv_n = 1.0 / float(nout)
    mean = jnp.sum(ym, axis=-1, keepdims=True) * inv_n
    var = jnp.sum(ym * ym, axis=-1, keepdims=True) * inv_n - mean * mean
    var = jnp.maximum(var, 0.0)          # one-pass variance cancellation safeguard
    y_hat = (y - mean) * jax.lax.rsqrt(var + eps)
    o_ref[...] = (y_hat * g_ref[...] + beta_ref[...]).astype(o_ref.dtype)


def text_encoder_head(x_cls, head, *, out_dtype=jnp.float32):
    """x_cls: (B, 768) CLS-token hidden states. head: prepared (padded) params.

    Returns (B, nout) in out_dtype (f32 by default to match nn.LayerNorm).
    """
    B = x_cls.shape[0]
    nout = head["nout"]
    nhid_pad = head["w1"].shape[1]
    nout_pad = head["w2"].shape[1]
    out_bytes = jnp.dtype(out_dtype).itemsize

    # ---- batch tile from an explicit VMEM budget --------------------------
    # Per-row live bytes: x (bf16, double-buffered), out (double-buffered),
    # f32 h + bf16 h intermediates, f32 y + LN temps.
    bytes_per_row = (BERT_DIM * 2 * 2
                     + nout_pad * out_bytes * 2
                     + nhid_pad * (4 + 2)
                     + nout_pad * 4 * 2)
    # Resident (constant index_map) operands are double-buffered by the pipeline.
    const_bytes = (2 * 2 * (BERT_DIM * nhid_pad + nhid_pad * nout_pad)
                   + 2 * 4 * (nhid_pad + 3 * nout_pad))
    row_budget = max(VMEM_BUDGET_BYTES - const_bytes, 4 * SUBLANE * bytes_per_row)
    tb_cap = max(SUBLANE,
                 min(TB_MAX, (row_budget // bytes_per_row) // SUBLANE * SUBLANE))

    n_steps = pl.cdiv(B, tb_cap)
    if B >= 2 * SUBLANE:
        n_steps = max(n_steps, 2)        # keep both v7x TensorCores busy
    tb = _round_up(pl.cdiv(B, n_steps), SUBLANE)
    grid = (pl.cdiv(B, tb),)             # no jnp.pad of x: the tail tile's OOB rows
                                          # read unspecified data and their stores
                                          # are dropped by Pallas (rows independent)

    x = x_cls.astype(jnp.bfloat16)
    _const = lambda i: (0, 0)

    flops = 2 * B * (BERT_DIM * nhid_pad + nhid_pad * nout_pad)
    bytes_accessed = (B * BERT_DIM * 2 + B * nout_pad * out_bytes
                      + head["w1"].size * 2 + head["w2"].size * 2
                      + (head["b1"].size + head["b2"].size
                         + head["gamma"].size + head["beta"].size) * 4)

    out = pl.pallas_call(
        functools.partial(_head_kernel, nout=nout, eps=LN_EPS),
        out_shape=jax.ShapeDtypeStruct((B, nout_pad), out_dtype),
        grid_spec=pltpu.PrefetchScalarGridSpec(
            num_scalar_prefetch=0,
            grid=grid,
            in_specs=[
                pl.BlockSpec((tb, BERT_DIM), lambda i: (i, 0)),   # x tile (pipelined)
                pl.BlockSpec((BERT_DIM, nhid_pad), _const),       # weights stay resident
                pl.BlockSpec((1, nhid_pad), _const),
                pl.BlockSpec((nhid_pad, nout_pad), _const),
                pl.BlockSpec((1, nout_pad), _const),
                pl.BlockSpec((1, nout_pad), _const),
                pl.BlockSpec((1, nout_pad), _const),
            ],
            out_specs=pl.BlockSpec((tb, nout_pad), lambda i: (i, 0)),
        ),
        compiler_params=pltpu.CompilerParams(
            dimension_semantics=("parallel",),
            vmem_limit_bytes=VMEM_LIMIT_BYTES),
        cost_estimate=pl.CostEstimate(
            flops=flops, transcendentals=B, bytes_accessed=bytes_accessed),
    )(x, head["w1"], head["b1"], head["w2"], head["b2"],
      head["gamma"], head["beta"])

    if nout == nout_pad:
        return out                       # no post-kernel copy at all
    return out[:, :nout]                 # lane-dim slice only (batch dim is exact)


def prepare_params(params):
    """One-time parameter prep: lane-dense padding + bf16 casts (hoisted out of
    the per-call forward so they never sit on the kernel's critical path)."""
    nhid = params["w1"].shape[1]
    nout = params["w2"].shape[1]
    nhid_pad = _round_up(nhid, LANE)
    nout_pad = _round_up(nout, LANE)
    head = {
        "w1": jnp.zeros((BERT_DIM, nhid_pad), jnp.bfloat16).at[:, :nhid].set(
            params["w1"].astype(jnp.bfloat16)),
        "b1": jnp.zeros((1, nhid_pad), jnp.float32).at[:, :nhid].set(
            params["b1"].reshape(1, -1)),
        "w2": jnp.zeros((nhid_pad, nout_pad), jnp.bfloat16).at[:nhid, :nout].set(
            params["w2"].astype(jnp.bfloat16)),
        "b2": jnp.zeros((1, nout_pad), jnp.float32).at[:, :nout].set(
            params["b2"].reshape(1, -1)),
        # gamma pads with 1, beta with 0; padded output columns never leave the kernel
        "gamma": jnp.ones((1, nout_pad), jnp.float32).at[:, :nout].set(
            params["ln_gamma"].reshape(1, -1)),
        "beta": jnp.zeros((1, nout_pad), jnp.float32).at[:, :nout].set(
            params["ln_beta"].reshape(1, -1)),
        "nout": nout,
    }
    return {"embed_table": params["embed_table"], "head": head}


def base_text_encoder_forward(prepared, input_ids, attention_mask):
    """Full forward. BERT is replaced by a deterministic embedding stub (glue)."""
    # TODO(synk): the pretrained BERT encoder (AutoModel) has no in-script
    # equivalent; attention_mask would be consumed inside BERT, unused by the stub.
    del attention_mask
    # Gather only the CLS row (avoids materializing a (B, S, 768) buffer).
    x_cls = prepared["embed_table"][input_ids[:, 0]]          # (B, 768) bf16
    return text_encoder_head(x_cls, prepared["head"])


def init_params(key, vocab_size, nhid, nout):
    k0, k1, k2, k3, k4 = jax.random.split(key, 5)
    return {
        # bf16 hidden states mimic a bf16 BERT encoder output (halves HBM bytes).
        "embed_table": (jax.random.normal(k0, (vocab_size, BERT_DIM), jnp.float32)
                        * 0.02).astype(jnp.bfloat16),
        "w1": jax.random.normal(k1, (BERT_DIM, nhid), jnp.float32) * 0.02,
        "b1": jax.random.normal(k2, (nhid,), jnp.float32) * 0.01,
        "w2": jax.random.normal(k3, (nhid, nout), jnp.float32) * 0.02,
        "b2": jax.random.normal(k4, (nout,), jnp.float32) * 0.01,
        "ln_gamma": jnp.ones((nout,), jnp.float32),
        "ln_beta": jnp.zeros((nout,), jnp.float32),
    }


def _reference(params, input_ids):
    """Plain-JAX reference for the same math (eval-mode dropout, bf16 matmul inputs)."""
    x = params["embed_table"][input_ids[:, 0]].astype(jnp.bfloat16)
    w1 = params["w1"].astype(jnp.bfloat16)
    w2 = params["w2"].astype(jnp.bfloat16)
    h = jnp.dot(x, w1, preferred_element_type=jnp.float32) + params["b1"]
    h = jnp.maximum(h, 0.0)
    y = jnp.dot(h.astype(jnp.bfloat16), w2,
                preferred_element_type=jnp.float32) + params["b2"]
    mean = jnp.mean(y, axis=-1, keepdims=True)
    var = jnp.mean((y - mean) ** 2, axis=-1, keepdims=True)
    return (y - mean) / jnp.sqrt(var + LN_EPS) * params["ln_gamma"] + params["ln_beta"]


if __name__ == "__main__":
    key = jax.random.PRNGKey(0)
    B, S, VOCAB = 2, 8, 100
    NHID, NOUT = 32, 32

    k_params, k_ids = jax.random.split(key)
    params = init_params(k_params, VOCAB, NHID, NOUT)
    prepared = prepare_params(params)          # one-time prep, off the hot path

    input_ids = jax.random.randint(k_ids, (B, S), 0, VOCAB, dtype=jnp.int32)
    attention_mask = jnp.ones((B, S), dtype=jnp.int32)

    out = base_text_encoder_forward(prepared, input_ids, attention_mask)
    out = jax.block_until_ready(out)

    ref = _reference(params, input_ids)
    assert out.shape == (B, NOUT)
    assert jnp.allclose(out, ref, atol=1e-3, rtol=1e-3), "mismatch vs reference"

    print("KERNEL_OK")
</pallas_src>

<mosaic_0001>
module attributes {stable_mosaic.version = 11 : i64} {
  func.func @_head_kernel(%arg0: i32, %arg1: memref<8x768xbf16, #tpu.memory_space<vmem>>, %arg2: memref<768x128xbf16, #tpu.memory_space<vmem>>, %arg3: memref<1x128xf32, #tpu.memory_space<vmem>>, %arg4: memref<128x128xbf16, #tpu.memory_space<vmem>>, %arg5: memref<1x128xf32, #tpu.memory_space<vmem>>, %arg6: memref<1x128xf32, #tpu.memory_space<vmem>>, %arg7: memref<1x128xf32, #tpu.memory_space<vmem>>, %arg8: memref<8x128xf32, #tpu.memory_space<vmem>>) attributes {dimension_semantics = [#tpu.dimension_semantics<parallel>], iteration_bounds = array<i64: 1>, scalar_prefetch = 0 : i64, scratch_operands = 0 : i64, tpu.core_type = #tpu.core_type<tc>, window_params = [{transform_indices = @transform_0, window_bounds = array<i64: 8, 768>}, {pipeline_mode = #tpu.pipeline_mode<synchronous>, transform_indices = @transform_1, window_bounds = array<i64: 768, 128>}, {pipeline_mode = #tpu.pipeline_mode<synchronous>, transform_indices = @transform_2, window_bounds = array<i64: 1, 128>}, {pipeline_mode = #tpu.pipeline_mode<synchronous>, transform_indices = @transform_3, window_bounds = array<i64: 128, 128>}, {pipeline_mode = #tpu.pipeline_mode<synchronous>, transform_indices = @transform_4, window_bounds = array<i64: 1, 128>}, {pipeline_mode = #tpu.pipeline_mode<synchronous>, transform_indices = @transform_5, window_bounds = array<i64: 1, 128>}, {pipeline_mode = #tpu.pipeline_mode<synchronous>, transform_indices = @transform_6, window_bounds = array<i64: 1, 128>}, {transform_indices = @transform_7, window_bounds = array<i64: 8, 128>}]} {
    %c0 = arith.constant 0 : index
    %c0_0 = arith.constant 0 : index
    %0 = vector.load %arg1[%c0, %c0_0] : memref<8x768xbf16, #tpu.memory_space<vmem>>, vector<8x768xbf16>
    %c0_1 = arith.constant 0 : index
    %c0_2 = arith.constant 0 : index
    %1 = vector.load %arg2[%c0_1, %c0_2] : memref<768x128xbf16, #tpu.memory_space<vmem>>, vector<768x128xbf16>
    %cst = arith.constant dense<0.000000e+00> : vector<8x128xf32>
    %2 = tpu.matmul %0, %1, %cst {dimension_numbers = #tpu.dot_dimension_numbers<[1], [0], [0], [1], [0, 0, 1, 1], [], []>} : vector<8x768xbf16>, vector<768x128xbf16>, vector<8x128xf32> -> vector<8x128xf32>
    %c0_3 = arith.constant 0 : index
    %c0_4 = arith.constant 0 : index
    %3 = vector.load %arg3[%c0_3, %c0_4] : memref<1x128xf32, #tpu.memory_space<vmem>>, vector<1x128xf32>
    %4 = vector.broadcast %3 : vector<1x128xf32> to vector<8x128xf32>
    %5 = arith.addf %2, %4 : vector<8x128xf32>
    %cst_5 = arith.constant 0.000000e+00 : f32
    %6 = vector.broadcast %cst_5 : f32 to vector<8x128xf32>
    %7 = arith.maximumf %5, %6 : vector<8x128xf32>
    %8 = arith.truncf %7 : vector<8x128xf32> to vector<8x128xbf16>
    %c0_6 = arith.constant 0 : index
    %c0_7 = arith.constant 0 : index
    %9 = vector.load %arg4[%c0_6, %c0_7] : memref<128x128xbf16, #tpu.memory_space<vmem>>, vector<128x128xbf16>
    %cst_8 = arith.constant dense<0.000000e+00> : vector<8x128xf32>
    %10 = tpu.matmul %8, %9, %cst_8 {dimension_numbers = #tpu.dot_dimension_numbers<[1], [0], [0], [1], [0, 0, 1, 1], [], []>} : vector<8x128xbf16>, vector<128x128xbf16>, vector<8x128xf32> -> vector<8x128xf32>
    %c0_9 = arith.constant 0 : index
    %c0_10 = arith.constant 0 : index
    %11 = vector.load %arg5[%c0_9, %c0_10] : memref<1x128xf32, #tpu.memory_space<vmem>>, vector<1x128xf32>
    %12 = vector.broadcast %11 : vector<1x128xf32> to vector<8x128xf32>
    %13 = arith.addf %10, %12 : vector<8x128xf32>
    %14 = tpu.iota {dimensions = array<i32: 1>} : vector<1x128xi32>
    %c32_i32 = arith.constant 32 : i32
    %15 = vector.broadcast %c32_i32 : i32 to vector<1x128xi32>
    %16 = arith.cmpi slt, %14, %15 : vector<1x128xi32>
    %cst_11 = arith.constant 0.000000e+00 : f32
    %17 = vector.shape_cast %16 : vector<1x128xi1> to vector<1x128xi1>
    %18 = vector.broadcast %17 : vector<1x128xi1> to vector<8x128xi1>
    %19 = vector.broadcast %cst_11 : f32 to vector<8x128xf32>
    %20 = arith.select %18, %13, %19 : vector<8x128xi1>, vector<8x128xf32>
    %cst_12 = arith.constant dense<0.000000e+00> : vector<8xf32>
    %21 = vector.multi_reduction <add>, %20, %cst_12 [1] : vector<8x128xf32> to vector<8xf32>
    %22 = vector.shape_cast %21 : vector<8xf32> to vector<8x1xf32>
    %cst_13 = arith.constant 3.125000e-02 : f32
    %23 = vector.broadcast %cst_13 : f32 to vector<8x1xf32>
    %24 = arith.mulf %22, %23 : vector<8x1xf32>
    %25 = arith.mulf %20, %20 : vector<8x128xf32>
    %cst_14 = arith.constant dense<0.000000e+00> : vector<8xf32>
    %26 = vector.multi_reduction <add>, %25, %cst_14 [1] : vector<8x128xf32> to vector<8xf32>
    %27 = vector.shape_cast %26 : vector<8xf32> to vector<8x1xf32>
    %cst_15 = arith.constant 3.125000e-02 : f32
    %28 = vector.broadcast %cst_15 : f32 to vector<8x1xf32>
    %29 = arith.mulf %27, %28 : vector<8x1xf32>
    %30 = arith.mulf %24, %24 : vector<8x1xf32>
    %31 = arith.subf %29, %30 : vector<8x1xf32>
    %cst_16 = arith.constant 0.000000e+00 : f32
    %32 = vector.broadcast %cst_16 : f32 to vector<8x1xf32>
    %33 = arith.maximumf %31, %32 : vector<8x1xf32>
    %34 = vector.broadcast %24 : vector<8x1xf32> to vector<8x128xf32>
    %35 = arith.subf %13, %34 : vector<8x128xf32>
    %cst_17 = arith.constant 9.99999974E-6 : f32
    %36 = vector.broadcast %cst_17 : f32 to vector<8x1xf32>
    %37 = arith.addf %33, %36 : vector<8x1xf32>
    %38 = math.rsqrt %37 : vector<8x1xf32>
    %39 = vector.broadcast %38 : vector<8x1xf32> to vector<8x128xf32>
    %40 = arith.mulf %35, %39 : vector<8x128xf32>
    %c0_18 = arith.constant 0 : index
    %c0_19 = arith.constant 0 : index
    %41 = vector.load %arg6[%c0_18, %c0_19] : memref<1x128xf32, #tpu.memory_space<vmem>>, vector<1x128xf32>
    %42 = vector.broadcast %41 : vector<1x128xf32> to vector<8x128xf32>
    %43 = arith.mulf %40, %42 : vector<8x128xf32>
    %c0_20 = arith.constant 0 : index
    %c0_21 = arith.constant 0 : index
    %44 = vector.load %arg7[%c0_20, %c0_21] : memref<1x128xf32, #tpu.memory_space<vmem>>, vector<1x128xf32>
    %45 = vector.broadcast %44 : vector<1x128xf32> to vector<8x128xf32>
    %46 = arith.addf %43, %45 : vector<8x128xf32>
    %c0_22 = arith.constant 0 : index
    %c0_23 = arith.constant 0 : index
    %47 = vector.load %arg8[%c0_22, %c0_23] : memref<8x128xf32, #tpu.memory_space<vmem>>, vector<8x128xf32>
    tpu.vector_store %arg8[%c0_22, %c0_23], %46 {strides = array<i32>} : memref<8x128xf32, #tpu.memory_space<vmem>>, vector<8x128xf32>,
    return
  }
  func.func @transform_0(%arg0: i32) -> (i32, i32) {
    %c0_i32 = arith.constant 0 : i32
    %c0_i32_0 = arith.constant 0 : i32
    return %arg0, %c0_i32 : i32, i32
  }
  func.func @transform_1(%arg0: i32) -> (i32, i32) {
    %c0_i32 = arith.constant 0 : i32
    %c0_i32_0 = arith.constant 0 : i32
    %c0_i32_1 = arith.constant 0 : i32
    return %c0_i32, %c0_i32_0 : i32, i32
  }
  func.func @transform_2(%arg0: i32) -> (i32, i32) {
    %c0_i32 = arith.constant 0 : i32
    %c0_i32_0 = arith.constant 0 : i32
    %c0_i32_1 = arith.constant 0 : i32
    return %c0_i32, %c0_i32_0 : i32, i32
  }
  func.func @transform_3(%arg0: i32) -> (i32, i32) {
    %c0_i32 = arith.constant 0 : i32
    %c0_i32_0 = arith.constant 0 : i32
    %c0_i32_1 = arith.constant 0 : i32
    return %c0_i32, %c0_i32_0 : i32, i32
  }
  func.func @transform_4(%arg0: i32) -> (i32, i32) {
    %c0_i32 = arith.constant 0 : i32
    %c0_i32_0 = arith.constant 0 : i32
    %c0_i32_1 = arith.constant 0 : i32
    return %c0_i32, %c0_i32_0 : i32, i32
  }
  func.func @transform_5(%arg0: i32) -> (i32, i32) {
    %c0_i32 = arith.constant 0 : i32
    %c0_i32_0 = arith.constant 0 : i32
    %c0_i32_1 = arith.constant 0 : i32
    return %c0_i32, %c0_i32_0 : i32, i32
  }
  func.func @transform_6(%arg0: i32) -> (i32, i32) {
    %c0_i32 = arith.constant 0 : i32
    %c0_i32_0 = arith.constant 0 : i32
    %c0_i32_1 = arith.constant 0 : i32
    return %c0_i32, %c0_i32_0 : i32, i32
  }
  func.func @transform_7(%arg0: i32) -> (i32, i32) {
    %c0_i32 = arith.constant 0 : i32
    %c0_i32_0 = arith.constant 0 : i32
    return %arg0, %c0_i32 : i32, i32
  }
}

</mosaic_0001>

<llo_original>
// kernel: tpu_custom_call.1
$region0: #{tpu_custom_call.1}
  #allocation0 [shape = 'u32[]', space=smem, size = 0x4, offset = 0x4, fixed_abs, tag = 'smem constant byte address 0x4 - core index']
  #allocation1 [shape = 'u32[144,128]{1,0:T(1,128)}', space=vmem, size = 0x12000, scoped, tag = 'internal scratch']
  %s0 = inlined_call_operand.hbm [shape: bf16[2,768], index: 0, kind: input, shape index: {}]
  %s1 = inlined_call_operand.hbm [shape: bf16[768,128], index: 1, kind: input, shape index: {}]
  %s2 = inlined_call_operand.vmem [shape: f32[1,128], index: 2, kind: input, shape index: {}]
  %s3 = inlined_call_operand.hbm [shape: bf16[128,128], index: 3, kind: input, shape index: {}]
  %s4 = inlined_call_operand.vmem [shape: f32[1,128], index: 4, kind: input, shape index: {}]
  %s5 = inlined_call_operand.vmem [shape: f32[1,128], index: 5, kind: input, shape index: {}]
  %s6 = inlined_call_operand.vmem [shape: f32[1,128], index: 6, kind: input, shape index: {}]
  %s7 = inlined_call_operand.hbm [shape: f32[2,128], index: 7, kind: output, shape index: {}]
  %s8 = sld [smem:[#allocation0]]
  $region50: #{tpu_custom_call.1} parent=0
    _
  %s10 = ssub.s32 1, %s8
  %s11 = scalar_select 0, %s10, %s8
  $region1: #{tpu_custom_call.1} parent=0
    #allocation2 [shape = 'u8[12288]{0}', space=vmem, size = 0x3000, scoped, tag = 'input window, operand 0, single buffered']
    #allocation3 [shape = 's32[1]{0}', space=sflag, size = 0x4, scoped, tag = 'scoped memory for tpu_custom_call.1']
    #allocation4 [shape = 's32[1]{0}', space=sflag, size = 0x4, scoped, tag = 'scoped memory for tpu_custom_call.1']
    #allocation5 [shape = 'u8[196608]{0}', space=vmem, size = 0x30000, scoped, tag = 'input window, operand 1, single buffered']
    #allocation6 [shape = 's32[1]{0}', space=sflag, size = 0x4, scoped, tag = 'scoped memory for tpu_custom_call.1']
    #allocation7 [shape = 'u8[32768]{0}', space=vmem, size = 0x8000, scoped, tag = 'input window, operand 3, single buffered']
    #allocation8 [shape = 'u8[4096]{0}', space=vmem, size = 0x1000, scoped, tag = 'output window, operand 0, single buffered']
    %12 = vsyncpa [#allocation3], 0
    %13 = vsyncpa [#allocation6], 0
    %14 = vsyncpa [#allocation4], 0
    // Predicated region
    $region2: #{tpu_custom_call.1} parent=1 // pred_check
      _
    $region3: #{tpu_custom_call.1} parent=1 // pred_check_branch
      %16 = sbr.rel (0) target = $region5
    $region4: #{tpu_custom_call.1} parent=1 // pred_region
      %s18 = ssub.s32 384, 96
      %19 = vsyncadd [#allocation3], %s18
      %s20 = sshll.u32 [#allocation2], 4
      %s21 = int_to_ptr.vmem [resolvable:$true] %s20
      %26 = dma.hbm_to_vmem [thread:$0]  %s0, 96, %s21, [#allocation3], 96, 96, 6
    $region5: #{tpu_custom_call.1} parent=1 // pred_fallthru
      _
    // Predicated region
    $region6: #{tpu_custom_call.1} parent=1 // pred_check
      _
    $region7: #{tpu_custom_call.1} parent=1 // pred_check_branch
      %28 = sbr.rel (0) target = $region9
    $region8: #{tpu_custom_call.1} parent=1 // pred_region
      %s30 = ssub.s32 6144, 6144
      %31 = vsyncadd [#allocation6], %s30
      %s32 = sshll.u32 [#allocation5], 4
      %s33 = int_to_ptr.vmem [resolvable:$true] %s32
      %38 = dma.hbm_to_vmem [thread:$0]  %s1, 6144, %s33, [#allocation6], 64, 64, 4
    $region9: #{tpu_custom_call.1} parent=1 // pred_fallthru
      _
    // Predicated region
    $region10: #{tpu_custom_call.1} parent=1 // pred_check
      _
    $region11: #{tpu_custom_call.1} parent=1 // pred_check_branch
      %40 = sbr.rel (0) target = $region13
    $region12: #{tpu_custom_call.1} parent=1 // pred_region
      _
    $region13: #{tpu_custom_call.1} parent=1 // pred_fallthru
      _
    // Predicated region
    $region14: #{tpu_custom_call.1} parent=1 // pred_check
      _
    $region15: #{tpu_custom_call.1} parent=1 // pred_check_branch
      %42 = sbr.rel (0) target = $region17
    $region16: #{tpu_custom_call.1} parent=1 // pred_region
      %s44 = ssub.s32 1024, 1024
      %45 = vsyncadd [#allocation6], %s44
      %s46 = sshll.u32 [#allocation7], 4
      %s47 = int_to_ptr.vmem [resolvable:$true] %s46
      %52 = dma.hbm_to_vmem [thread:$0]  %s3, 1024, %s47, [#allocation6], 64, 64, 4
    $region17: #{tpu_custom_call.1} parent=1 // pred_fallthru
      _
    // Predicated region
    $region18: #{tpu_custom_call.1} parent=1 // pred_check
      _
    $region19: #{tpu_custom_call.1} parent=1 // pred_check_branch
      %54 = sbr.rel (0) target = $region21
    $region20: #{tpu_custom_call.1} parent=1 // pred_region
      _
    $region21: #{tpu_custom_call.1} parent=1 // pred_fallthru
      _
    // Predicated region
    $region22: #{tpu_custom_call.1} parent=1 // pred_check
      _
    $region23: #{tpu_custom_call.1} parent=1 // pred_check_branch
      %56 = sbr.rel (0) target = $region25
    $region24: #{tpu_custom_call.1} parent=1 // pred_region
      _
    $region25: #{tpu_custom_call.1} parent=1 // pred_fallthru
      _
    // Predicated region
    $region26: #{tpu_custom_call.1} parent=1 // pred_check
      _
    $region27: #{tpu_custom_call.1} parent=1 // pred_check_branch
      %58 = sbr.rel (0) target = $region29
    $region28: #{tpu_custom_call.1} parent=1 // pred_region
      _
    $region29: #{tpu_custom_call.1} parent=1 // pred_fallthru
      _
    // Predicated region
    $region30: #{tpu_custom_call.1} parent=1 // pred_check
      _
    $region31: #{tpu_custom_call.1} parent=1 // pred_check_branch
      %60 = sbr.rel (0) target = $region33
    $region32: #{tpu_custom_call.1} parent=1 // pred_region
      %61 = dma.done [#allocation3], 384
    $region33: #{tpu_custom_call.1} parent=1 // pred_fallthru
      _
    // Predicated region
    $region34: #{tpu_custom_call.1} parent=1 // pred_check
      _
    $region35: #{tpu_custom_call.1} parent=1 // pred_check_branch
      %63 = sbr.rel (0) target = $region37
    $region36: #{tpu_custom_call.1} parent=1 // pred_region
      %64 = dma.done [#allocation6], 6144
    $region37: #{tpu_custom_call.1} parent=1 // pred_fallthru
      _
    // Predicated region
    $region38: #{tpu_custom_call.1} parent=1 // pred_check
      _
    $region39: #{tpu_custom_call.1} parent=1 // pred_check_branch
      %66 = sbr.rel (0) target = $region41
    $region40: #{tpu_custom_call.1} parent=1 // pred_region
      %67 = dma.done [#allocation6], 1024
    $region41: #{tpu_custom_call.1} parent=1 // pred_fallthru
      _
    %v69 = vld [vmem:[#allocation2] sm:$0x3f]
    %v70 = vld [vmem:[#allocation2 + $0x6] sm:$0x3f]
    %v71 = vld [vmem:[#allocation2 + $0xc] sm:$0x3f]
    %v72 = vld [vmem:[#allocation2 + $0x12] sm:$0x3f]
    %v73 = vld [vmem:[#allocation5] sm:$0xf]
    %v74 = vld [vmem:[#allocation5 + $0x4] sm:$0xf]
    %v75 = vld [vmem:[#allocation5 + $0x8] sm:$0xf]
    %v76 = vld [vmem:[#allocation5 + $0xc] sm:$0xf]
    %v77 = vld [vmem:[#allocation5 + $0x10] sm:$0xf]
    %v78 = vld [vmem:[#allocation5 + $0x14] sm:$0xf]
    %v79 = vld [vmem:[#allocation5 + $0x18] sm:$0xf]
    %v80 = vld [vmem:[#allocation5 + $0x1c] sm:$0xf]
    %v81 = vld [vmem:[#allocation5 + $0x20] sm:$0xf]
    %v82 = vld [vmem:[#allocation5 + $0x24] sm:$0xf]
    %v83 = vld [vmem:[#allocation5 + $0x28] sm:$0xf]
    %v84 = vld [vmem:[#allocation5 + $0x2c] sm:$0xf]
    %v85 = vld [vmem:[#allocation5 + $0x30] sm:$0xf]
    %v86 = vld [vmem:[#allocation5 + $0x34] sm:$0xf]
    %v87 = vld [vmem:[#allocation5 + $0x38] sm:$0xf]
    %v88 = vld [vmem:[#allocation5 + $0x3c] sm:$0xf]
    %v89 = vld [vmem:[#allocation5 + $0x40] sm:$0xf]
    %v90 = vld [vmem:[#allocation5 + $0x44] sm:$0xf]
    %v91 = vld [vmem:[#allocation5 + $0x48] sm:$0xf]
    %v92 = vld [vmem:[#allocation5 + $0x4c] sm:$0xf]
    %v93 = vld [vmem:[#allocation5 + $0x50] sm:$0xf]
    %v94 = vld [vmem:[#allocation5 + $0x54] sm:$0xf]
    %v95 = vld [vmem:[#allocation5 + $0x58] sm:$0xf]
    %v96 = vld [vmem:[#allocation5 + $0x5c] sm:$0xf]
    %v97 = vld [vmem:[#allocation5 + $0x60] sm:$0xf]
    %v98 = vld [vmem:[#allocation5 + $0x64] sm:$0xf]
    %v99 = vld [vmem:[#allocation5 + $0x68] sm:$0xf]
    %v100 = vld [vmem:[#allocation5 + $0x6c] sm:$0xf]
    %v101 = vld [vmem:[#allocation5 + $0x70] sm:$0xf]
    %v102 = vld [vmem:[#allocation5 + $0x74] sm:$0xf]
    %v103 = vld [vmem:[#allocation5 + $0x78] sm:$0xf]
    %v104 = vld [vmem:[#allocation5 + $0x7c] sm:$0xf]
    %v105 = vld [vmem:[#allocation5 + $0x80] sm:$0xf]
    %v106 = vld [vmem:[#allocation5 + $0x84] sm:$0xf]
    %v107 = vld [vmem:[#allocation5 + $0x88] sm:$0xf]
    %v108 = vld [vmem:[#allocation5 + $0x8c] sm:$0xf]
    %v109 = vld [vmem:[#allocation5 + $0x90] sm:$0xf]
    %v110 = vld [vmem:[#allocation5 + $0x94] sm:$0xf]
    %v111 = vld [vmem:[#allocation5 + $0x98] sm:$0xf]
    %v112 = vld [vmem:[#allocation5 + $0x9c] sm:$0xf]
    %v113 = vld [vmem:[#allocation5 + $0xa0] sm:$0xf]
    %v114 = vld [vmem:[#allocation5 + $0xa4] sm:$0xf]
    %v115 = vld [vmem:[#allocation5 + $0xa8] sm:$0xf]
    %v116 = vld [vmem:[#allocation5 + $0xac] sm:$0xf]
    %v117 = vld [vmem:[#allocation5 + $0xb0] sm:$0xf]
    %v118 = vld [vmem:[#allocation5 + $0xb4] sm:$0xf]
    %v119 = vld [vmem:[#allocation5 + $0xb8] sm:$0xf]
    %v120 = vld [vmem:[#allocation5 + $0xbc] sm:$0xf]
    %v121 = vld [vmem:[#allocation5 + $0xc0] sm:$0xf]
    %v122 = vld [vmem:[#allocation5 + $0xc4] sm:$0xf]
    %v123 = vld [vmem:[#allocation5 + $0xc8] sm:$0xf]
    %v124 = vld [vmem:[#allocation5 + $0xcc] sm:$0xf]
    %v125 = vld [vmem:[#allocation5 + $0xd0] sm:$0xf]
    %v126 = vld [vmem:[#allocation5 + $0xd4] sm:$0xf]
    %v127 = vld [vmem:[#allocation5 + $0xd8] sm:$0xf]
    %v128 = vld [vmem:[#allocation5 + $0xdc] sm:$0xf]
    %v129 = vld [vmem:[#allocation5 + $0xe0] sm:$0xf]
    %v130 = vld [vmem:[#allocation5 + $0xe4] sm:$0xf]
    %v131 = vld [vmem:[#allocation5 + $0xe8] sm:$0xf]
    %v132 = vld [vmem:[#allocation5 + $0xec] sm:$0xf]
    %v133 = vld [vmem:[#allocation5 + $0xf0] sm:$0xf]
    %v134 = vld [vmem:[#allocation5 + $0xf4] sm:$0xf]
    %v135 = vld [vmem:[#allocation5 + $0xf8] sm:$0xf]
    %v136 = vld [vmem:[#allocation5 + $0xfc] sm:$0xf]
    %v137 = vld [vmem:[#allocation5 + $0x100] sm:$0xf]
    %v138 = vld [vmem:[#allocation5 + $0x104] sm:$0xf]
    %v139 = vld [vmem:[#allocation5 + $0x108] sm:$0xf]
    %v140 = vld [vmem:[#allocation5 + $0x10c] sm:$0xf]
    %v141 = vld [vmem:[#allocation5 + $0x110] sm:$0xf]
    %v142 = vld [vmem:[#allocation5 + $0x114] sm:$0xf]
    %v143 = vld [vmem:[#allocation5 + $0x118] sm:$0xf]
    %v144 = vld [vmem:[#allocation5 + $0x11c] sm:$0xf]
    %v145 = vld [vmem:[#allocation5 + $0x120] sm:$0xf]
    %v146 = vld [vmem:[#allocation5 + $0x124] sm:$0xf]
    %v147 = vld [vmem:[#allocation5 + $0x128] sm:$0xf]
    %v148 = vld [vmem:[#allocation5 + $0x12c] sm:$0xf]
    %v149 = vld [vmem:[#allocation5 + $0x130] sm:$0xf]
    %v150 = vld [vmem:[#allocation5 + $0x134] sm:$0xf]
    %v151 = vld [vmem:[#allocation5 + $0x138] sm:$0xf]
    %v152 = vld [vmem:[#allocation5 + $0x13c] sm:$0xf]
    %v153 = vld [vmem:[#allocation5 + $0x140] sm:$0xf]
    %v154 = vld [vmem:[#allocation5 + $0x144] sm:$0xf]
    %v155 = vld [vmem:[#allocation5 + $0x148] sm:$0xf]
    %v156 = vld [vmem:[#allocation5 + $0x14c] sm:$0xf]
    %v157 = vld [vmem:[#allocation5 + $0x150] sm:$0xf]
    %v158 = vld [vmem:[#allocation5 + $0x154] sm:$0xf]
    %v159 = vld [vmem:[#allocation5 + $0x158] sm:$0xf]
    %v160 = vld [vmem:[#allocation5 + $0x15c] sm:$0xf]
    %v161 = vld [vmem:[#allocation5 + $0x160] sm:$0xf]
    %v162 = vld [vmem:[#allocation5 + $0x164] sm:$0xf]
    %v163 = vld [vmem:[#allocation5 + $0x168] sm:$0xf]
    %v164 = vld [vmem:[#allocation5 + $0x16c] sm:$0xf]
    %v165 = vld [vmem:[#allocation5 + $0x170] sm:$0xf]
    %v166 = vld [vmem:[#allocation5 + $0x174] sm:$0xf]
    %v167 = vld [vmem:[#allocation5 + $0x178] sm:$0xf]
    %v168 = vld [vmem:[#allocation5 + $0x17c] sm:$0xf]
    %v169 = vld [vmem:[%s2] sm:$0x1]
    %v171 = vlaneseq
    %v172 = vshrl.u32 %v171, 7
    %v173 = vsub.s32 0, %v172
    %v174 = vrot.slane %v169, %v173
    %v180 = vcombine.low %v69, %v70
    %v181 = vcombine.high %v69, %v70
    %v182 = vcombine.low %v71, %v72
    %v183 = vcombine.high %v71, %v72
    %v185 = vunpack.c.l.s4 1966171168
    %v186 = vunpack.c.0.s8 %v185
    %v187 = vlaneseq
    %v188 = vshrl.u32 %v187, 7
    %v189 = vsub.s32 %v186, %v188
    %v190 = vrot.slane %v180, %v189
    %v192 = vunpack.c.l.s4 1966171168
    %v193 = vunpack.c.0.s8 %v192
    %v194 = vlaneseq
    %v195 = vshrl.u32 %v194, 7
    %v196 = vsub.s32 %v193, %v195
    %v197 = vrot.slane %v181, %v196
    %v199 = vunpack.c.l.s4 1966171168
    %v200 = vunpack.c.0.s8 %v199
    %v201 = vlaneseq
    %v202 = vshrl.u32 %v201, 7
    %v203 = vsub.s32 %v200, %v202
    %v204 = vrot.slane %v182, %v203
    %v206 = vunpack.c.l.s4 1966171168
    %v207 = vunpack.c.0.s8 %v206
    %v208 = vlaneseq
    %v209 = vshrl.u32 %v208, 7
    %v210 = vsub.s32 %v207, %v209
    %v211 = vrot.slane %v183, %v210
    %v212 = vcombine.low %v190, %v204
    %v213 = vcombine.high %v190, %v204
    %v214 = vcombine.low %v197, %v211
    %v215 = vcombine.high %v197, %v211
    %v217 = vunpack.c.l.s4 1966171168
    %v218 = vunpack.c.0.s8 %v217
    %v219 = vlaneseq
    %v220 = vshrl.u32 %v219, 7
    %v221 = vsub.s32 %v218, %v220
    %v222 = vrot.slane %v212, %v221
    %v224 = vunpack.c.l.s4 1966171168
    %v225 = vunpack.c.0.s8 %v224
    %v226 = vlaneseq
    %v227 = vshrl.u32 %v226, 7
    %v228 = vsub.s32 %v225, %v227
    %v229 = vrot.slane %v214, %v228
    %v231 = vunpack.c.l.s4 1966171168
    %v232 = vunpack.c.0.s8 %v231
    %v233 = vlaneseq
    %v234 = vshrl.u32 %v233, 7
    %v235 = vsub.s32 %v232, %v234
    %v236 = vrot.slane %v213, %v235
    %v238 = vunpack.c.l.s4 1966171168
    %v239 = vunpack.c.0.s8 %v238
    %v240 = vlaneseq
    %v241 = vshrl.u32 %v240, 7
    %v242 = vsub.s32 %v239, %v241
    %v243 = vrot.slane %v215, %v242
    %v244 = vcombine.high %v222, %v222
    %v245 = vcombine.high %v236, %v236
    %v348 = vunpack.c.l.b16 %v73
    %v349 = vunpack.c.l.b16 %v74
    %v350 = vunpack.c.l.b16 %v75
    %v351 = vunpack.c.l.b16 %v76
    %v352 = vunpack.c.l.b16 %v77
    %v353 = vunpack.c.l.b16 %v78
    %v354 = vunpack.c.l.b16 %v79
    %v355 = vunpack.c.l.b16 %v80
    %v356 = vunpack.c.l.b16 %v81
    %v357 = vunpack.c.l.b16 %v82
    %v358 = vunpack.c.l.b16 %v83
    %v359 = vunpack.c.l.b16 %v84
    %v360 = vunpack.c.l.b16 %v85
    %v361 = vunpack.c.l.b16 %v86
    %v362 = vunpack.c.l.b16 %v87
    %v363 = vunpack.c.l.b16 %v88
    %v364 = vunpack.c.l.b16 %v89
    %v365 = vunpack.c.l.b16 %v90
    %v366 = vunpack.c.l.b16 %v91
    %v367 = vunpack.c.l.b16 %v92
    %v368 = vunpack.c.l.b16 %v93
    %v369 = vunpack.c.l.b16 %v94
    %v370 = vunpack.c.l.b16 %v95
    %v371 = vunpack.c.l.b16 %v96
    %v372 = vunpack.c.l.b16 %v97
    %v373 = vunpack.c.l.b16 %v98
    %v374 = vunpack.c.l.b16 %v99
    %v375 = vunpack.c.l.b16 %v100
    %v376 = vunpack.c.l.b16 %v101
    %v377 = vunpack.c.l.b16 %v102
    %v378 = vunpack.c.l.b16 %v103
    %v379 = vunpack.c.l.b16 %v104
    %v380 = vunpack.c.l.b16 %v105
    %v381 = vunpack.c.l.b16 %v106
    %v382 = vunpack.c.l.b16 %v107
    %v383 = vunpack.c.l.b16 %v108
    %v384 = vunpack.c.l.b16 %v109
    %v385 = vunpack.c.l.b16 %v110
    %v386 = vunpack.c.l.b16 %v111
    %v387 = vunpack.c.l.b16 %v112
    %v388 = vunpack.c.l.b16 %v113
    %v389 = vunpack.c.l.b16 %v114
    %v390 = vunpack.c.l.b16 %v115
    %v391 = vunpack.c.l.b16 %v116
    %v392 = vunpack.c.l.b16 %v117
    %v393 = vunpack.c.l.b16 %v118
    %v394 = vunpack.c.l.b16 %v119
    %v395 = vunpack.c.l.b16 %v120
    %v396 = vunpack.c.l.b16 %v121
    %v397 = vunpack.c.l.b16 %v122
    %v398 = vunpack.c.l.b16 %v123
    %v399 = vunpack.c.l.b16 %v124
    %v400 = vunpack.c.l.b16 %v125
    %v401 = vunpack.c.l.b16 %v126
    %v402 = vunpack.c.l.b16 %v127
    %v403 = vunpack.c.l.b16 %v128
    %v404 = vunpack.c.l.b16 %v129
    %v405 = vunpack.c.l.b16 %v130
    %v406 = vunpack.c.l.b16 %v131
    %v407 = vunpack.c.l.b16 %v132
    %v408 = vunpack.c.l.b16 %v133
    %v409 = vunpack.c.l.b16 %v134
    %v410 = vunpack.c.l.b16 %v135
    %v411 = vunpack.c.l.b16 %v136
    %v412 = vunpack.c.l.b16 %v137
    %v413 = vunpack.c.l.b16 %v138
    %v414 = vunpack.c.l.b16 %v139
    %v415 = vunpack.c.l.b16 %v140
    %v416 = vunpack.c.l.b16 %v141
    %v417 = vunpack.c.l.b16 %v142
    %v418 = vunpack.c.l.b16 %v143
    %v419 = vunpack.c.l.b16 %v144
    %v420 = vunpack.c.l.b16 %v145
    %v421 = vunpack.c.l.b16 %v146
    %v422 = vunpack.c.l.b16 %v147
    %v423 = vunpack.c.l.b16 %v148
    %v424 = vunpack.c.l.b16 %v149
    %v425 = vunpack.c.l.b16 %v150
    %v426 = vunpack.c.l.b16 %v151
    %v427 = vunpack.c.l.b16 %v152
    %v428 = vunpack.c.l.b16 %v153
    %v429 = vunpack.c.l.b16 %v154
    %v430 = vunpack.c.l.b16 %v155
    %v431 = vunpack.c.l.b16 %v156
    %v432 = vunpack.c.l.b16 %v157
    %v433 = vunpack.c.l.b16 %v158
    %v434 = vunpack.c.l.b16 %v159
    %v435 = vunpack.c.l.b16 %v160
    %v436 = vunpack.c.l.b16 %v161
    %v437 = vunpack.c.l.b16 %v162
    %v438 = vunpack.c.l.b16 %v163
    %v439 = vunpack.c.l.b16 %v164
    %v440 = vunpack.c.l.b16 %v165
    %v441 = vunpack.c.l.b16 %v166
    %v442 = vunpack.c.l.b16 %v167
    %v443 = vunpack.c.l.b16 %v168
    %v444 = vpack.c.b16 %v349, %v348
    %v445 = vpack.c.b16 %v351, %v350
    %v446 = vpack.c.b16 %v353, %v352
    %v447 = vpack.c.b16 %v355, %v354
    %v448 = vpack.c.b16 %v357, %v356
    %v449 = vpack.c.b16 %v359, %v358
    %v450 = vpack.c.b16 %v361, %v360
    %v451 = vpack.c.b16 %v363, %v362
    %v452 = vpack.c.b16 %v365, %v364
    %v453 = vpack.c.b16 %v367, %v366
    %v454 = vpack.c.b16 %v369, %v368
    %v455 = vpack.c.b16 %v371, %v370
    %v456 = vpack.c.b16 %v373, %v372
    %v457 = vpack.c.b16 %v375, %v374
    %v458 = vpack.c.b16 %v377, %v376
    %v459 = vpack.c.b16 %v379, %v378
    %v460 = vpack.c.b16 %v381, %v380
    %v461 = vpack.c.b16 %v383, %v382
    %v462 = vpack.c.b16 %v385, %v384
    %v463 = vpack.c.b16 %v387, %v386
    %v464 = vpack.c.b16 %v389, %v388
    %v465 = vpack.c.b16 %v391, %v390
    %v466 = vpack.c.b16 %v393, %v392
    %v467 = vpack.c.b16 %v395, %v394
    %v468 = vpack.c.b16 %v397, %v396
    %v469 = vpack.c.b16 %v399, %v398
    %v470 = vpack.c.b16 %v401, %v400
    %v471 = vpack.c.b16 %v403, %v402
    %v472 = vpack.c.b16 %v405, %v404
    %v473 = vpack.c.b16 %v407, %v406
    %v474 = vpack.c.b16 %v409, %v408
    %v475 = vpack.c.b16 %v411, %v410
    %v476 = vpack.c.b16 %v413, %v412
    %v477 = vpack.c.b16 %v415, %v414
    %v478 = vpack.c.b16 %v417, %v416
    %v479 = vpack.c.b16 %v419, %v418
    %v480 = vpack.c.b16 %v421, %v420
    %v481 = vpack.c.b16 %v423, %v422
    %v482 = vpack.c.b16 %v425, %v424
    %v483 = vpack.c.b16 %v427, %v426
    %v484 = vpack.c.b16 %v429, %v428
    %v485 = vpack.c.b16 %v431, %v430
    %v486 = vpack.c.b16 %v433, %v432
    %v487 = vpack.c.b16 %v435, %v434
    %v488 = vpack.c.b16 %v437, %v436
    %v489 = vpack.c.b16 %v439, %v438
    %v490 = vpack.c.b16 %v441, %v440
    %v491 = vpack.c.b16 %v443, %v442
    %540 = vmatprep.subr.bf16.mxu0 0
    %541 = vmatpush1.bf16.msra.mxu0 %v444
    %542 = vmatprep.subr.bf16.mxu0 0
    %543 = vmatpush1.bf16.msra.mxu0 %v445
    %544 = vmatprep.subr.bf16.mxu0 0
    %545 = vmatpush1.bf16.msra.mxu0 %v446
    %546 = vmatprep.subr.bf16.mxu0 0
    %547 = vmatpush1.bf16.msra.mxu0 %v447
    %548 = vmatprep.subr.bf16.mxu0 0
    %549 = vmatpush1.bf16.msra.mxu0 %v448
    %550 = vmatprep.subr.bf16.mxu0 0
    %551 = vmatpush1.bf16.msra.mxu0 %v449
    %552 = vmatprep.subr.bf16.mxu0 0
    %553 = vmatpush1.bf16.msra.mxu0 %v450
    %554 = vmatprep.subr.bf16.mxu0 0
    %555 = vmatpush1.bf16.msra.mxu0 %v451
    %556 = vmatprep.subr.bf16.mxu0 0
    %557 = vmatpush1.bf16.msra.mxu0 %v452
    %558 = vmatprep.subr.bf16.mxu0 0
    %559 = vmatpush1.bf16.msra.mxu0 %v453
    %560 = vmatprep.subr.bf16.mxu0 0
    %561 = vmatpush1.bf16.msra.mxu0 %v454
    %562 = vmatprep.subr.bf16.mxu0 0
    %563 = vmatpush1.bf16.msra.mxu0 %v455
    %564 = vmatprep.subr.bf16.mxu0 0
    %565 = vmatpush1.bf16.msra.mxu0 %v456
    %566 = vmatprep.subr.bf16.mxu0 0
    %567 = vmatpush1.bf16.msra.mxu0 %v457
    %568 = vmatprep.subr.bf16.mxu0 0
    %569 = vmatpush1.bf16.msra.mxu0 %v458
    %570 = vmatprep.subr.bf16.mxu0 0
    %571 = vmatpush1.bf16.msra.mxu0 %v459
    %572 = vmatprep.mubr.bf16.mxu0 %v236
    %573 = vmatmul.mubr.bf16.gmra.mrb[0].mxu0 %v222
    %v574 = vpop.f32.mrb[0].mxu0
    %v575 = vadd.f32 %v174, %v574
    %v576 = vpop.f32.mrb[0].mxu0
    %v577 = vpop.f32.mrb[0].mxu0
    %v578 = vpop.f32.mrb[0].mxu0
    %579 = vdwg.mxu0
    %580 = vmatprep.subr.bf16.mxu0 0
    %581 = vmatpush1.bf16.msra.mxu0 %v460
    %582 = vmatprep.subr.bf16.mxu0 0
    %583 = vmatpush1.bf16.msra.mxu0 %v461
    %584 = vmatprep.subr.bf16.mxu0 0
    %585 = vmatpush1.bf16.msra.mxu0 %v462
    %586 = vmatprep.subr.bf16.mxu0 0
    %587 = vmatpush1.bf16.msra.mxu0 %v463
    %588 = vmatprep.subr.bf16.mxu0 0
    %589 = vmatpush1.bf16.msra.mxu0 %v464
    %590 = vmatprep.subr.bf16.mxu0 0
    %591 = vmatpush1.bf16.msra.mxu0 %v465
    %592 = vmatprep.subr.bf16.mxu0 0
    %593 = vmatpush1.bf16.msra.mxu0 %v466
    %594 = vmatprep.subr.bf16.mxu0 0
    %595 = vmatpush1.bf16.msra.mxu0 %v467
    %596 = vmatprep.subr.bf16.mxu0 0
    %597 = vmatpush1.bf16.msra.mxu0 %v468
    %598 = vmatprep.subr.bf16.mxu0 0
    %599 = vmatpush1.bf16.msra.mxu0 %v469
    %600 = vmatprep.subr.bf16.mxu0 0
    %601 = vmatpush1.bf16.msra.mxu0 %v470
    %602 = vmatprep.subr.bf16.mxu0 0
    %603 = vmatpush1.bf16.msra.mxu0 %v471
    %604 = vmatprep.subr.bf16.mxu0 0
    %605 = vmatpush1.bf16.msra.mxu0 %v472
    %606 = vmatprep.subr.bf16.mxu0 0
    %607 = vmatpush1.bf16.msra.mxu0 %v473
    %608 = vmatprep.subr.bf16.mxu0 0
    %609 = vmatpush1.bf16.msra.mxu0 %v474
    %610 = vmatprep.subr.bf16.mxu0 0
    %611 = vmatpush1.bf16.msra.mxu0 %v475
    %612 = vmatprep.mubr.bf16.mxu0 %v245
    %613 = vmatmul.mubr.bf16.gmra.mrb[0].mxu0 %v244
    %v614 = vpop.f32.mrb[0].mxu0
    %v615 = vadd.f32 %v575, %v614
    %v616 = vpop.f32.mrb[0].mxu0
    %v617 = vpop.f32.mrb[0].mxu0
    %v618 = vpop.f32.mrb[0].mxu0
    %619 = vdwg.mxu0
    %620 = vmatprep.subr.bf16.mxu0 0
    %621 = vmatpush1.bf16.msra.mxu0 %v476
    %622 = vmatprep.subr.bf16.mxu0 0
    %623 = vmatpush1.bf16.msra.mxu0 %v477
    %624 = vmatprep.subr.bf16.mxu0 0
    %625 = vmatpush1.bf16.msra.mxu0 %v478
    %626 = vmatprep.subr.bf16.mxu0 0
    %627 = vmatpush1.bf16.msra.mxu0 %v479
    %628 = vmatprep.subr.bf16.mxu0 0
    %629 = vmatpush1.bf16.msra.mxu0 %v480
    %630 = vmatprep.subr.bf16.mxu0 0
    %631 = vmatpush1.bf16.msra.mxu0 %v481
    %632 = vmatprep.subr.bf16.mxu0 0
    %633 = vmatpush1.bf16.msra.mxu0 %v482
    %634 = vmatprep.subr.bf16.mxu0 0
    %635 = vmatpush1.bf16.msra.mxu0 %v483
    %636 = vmatprep.subr.bf16.mxu0 0
    %637 = vmatpush1.bf16.msra.mxu0 %v484
    %638 = vmatprep.subr.bf16.mxu0 0
    %639 = vmatpush1.bf16.msra.mxu0 %v485
    %640 = vmatprep.subr.bf16.mxu0 0
    %641 = vmatpush1.bf16.msra.mxu0 %v486
    %642 = vmatprep.subr.bf16.mxu0 0
    %643 = vmatpush1.bf16.msra.mxu0 %v487
    %644 = vmatprep.subr.bf16.mxu0 0
    %645 = vmatpush1.bf16.msra.mxu0 %v488
    %646 = vmatprep.subr.bf16.mxu0 0
    %647 = vmatpush1.bf16.msra.mxu0 %v489
    %648 = vmatprep.subr.bf16.mxu0 0
    %649 = vmatpush1.bf16.msra.mxu0 %v490
    %650 = vmatprep.subr.bf16.mxu0 0
    %651 = vmatpush1.bf16.msra.mxu0 %v491
    %652 = vmatprep.mubr.bf16.mxu0 %v243
    %653 = vmatmul.mubr.bf16.gmra.mrb[0].mxu0 %v229
    %v654 = vpop.f32.mrb[0].mxu0
    %v655 = vadd.f32 %v615, %v654
    %v656 = vpop.f32.mrb[0].mxu0
    %v657 = vpop.f32.mrb[0].mxu0
    %v658 = vpop.f32.mrb[0].mxu0
    %659 = vdwg.mxu0
    %v660 = vmax.f32 %v655, 0.0
    %v661 = vpack.c.bf16 %v660, %v660
    %v662 = vld [vmem:[#allocation7] sm:$0xf]
    %v663 = vld [vmem:[#allocation7 + $0x4] sm:$0xf]
    %v664 = vld [vmem:[#allocation7 + $0x8] sm:$0xf]
    %v665 = vld [vmem:[#allocation7 + $0xc] sm:$0xf]
    %v666 = vld [vmem:[#allocation7 + $0x10] sm:$0xf]
    %v667 = vld [vmem:[#allocation7 + $0x14] sm:$0xf]
    %v668 = vld [vmem:[#allocation7 + $0x18] sm:$0xf]
    %v669 = vld [vmem:[#allocation7 + $0x1c] sm:$0xf]
    %v670 = vld [vmem:[#allocation7 + $0x20] sm:$0xf]
    %v671 = vld [vmem:[#allocation7 + $0x24] sm:$0xf]
    %v672 = vld [vmem:[#allocation7 + $0x28] sm:$0xf]
    %v673 = vld [vmem:[#allocation7 + $0x2c] sm:$0xf]
    %v674 = vld [vmem:[#allocation7 + $0x30] sm:$0xf]
    %v675 = vld [vmem:[#allocation7 + $0x34] sm:$0xf]
    %v676 = vld [vmem:[#allocation7 + $0x38] sm:$0xf]
    %v677 = vld [vmem:[#allocation7 + $0x3c] sm:$0xf]
    %v678 = vld [vmem:[%s4] sm:$0x1]
    %v680 = vlaneseq
    %v681 = vshrl.u32 %v680, 7
    %v682 = vsub.s32 0, %v681
    %v683 = vrot.slane %v678, %v682
    %v701 = vunpack.c.l.b16 %v662
    %v702 = vunpack.c.l.b16 %v663
    %v703 = vunpack.c.l.b16 %v664
    %v704 = vunpack.c.l.b16 %v665
    %v705 = vunpack.c.l.b16 %v666
    %v706 = vunpack.c.l.b16 %v667
    %v707 = vunpack.c.l.b16 %v668
    %v708 = vunpack.c.l.b16 %v669
    %v709 = vunpack.c.l.b16 %v670
    %v710 = vunpack.c.l.b16 %v671
    %v711 = vunpack.c.l.b16 %v672
    %v712 = vunpack.c.l.b16 %v673
    %v713 = vunpack.c.l.b16 %v674
    %v714 = vunpack.c.l.b16 %v675
    %v715 = vunpack.c.l.b16 %v676
    %v716 = vunpack.c.l.b16 %v677
    %v717 = vpack.c.b16 %v702, %v701
    %v718 = vpack.c.b16 %v704, %v703
    %v719 = vpack.c.b16 %v706, %v705
    %v720 = vpack.c.b16 %v708, %v707
    %v721 = vpack.c.b16 %v710, %v709
    %v722 = vpack.c.b16 %v712, %v711
    %v723 = vpack.c.b16 %v714, %v713
    %v724 = vpack.c.b16 %v716, %v715
    %733 = vmatprep.subr.bf16.mxu0 0
    %734 = vmatpush1.bf16.msra.mxu0 %v717
    %735 = vmatprep.subr.bf16.mxu0 0
    %736 = vmatpush1.bf16.msra.mxu0 %v718
    %737 = vmatprep.subr.bf16.mxu0 0
    %738 = vmatpush1.bf16.msra.mxu0 %v719
    %739 = vmatprep.subr.bf16.mxu0 0
    %740 = vmatpush1.bf16.msra.mxu0 %v720
    %741 = vmatprep.subr.bf16.mxu0 0
    %742 = vmatpush1.bf16.msra.mxu0 %v721
    %743 = vmatprep.subr.bf16.mxu0 0
    %744 = vmatpush1.bf16.msra.mxu0 %v722
    %745 = vmatprep.subr.bf16.mxu0 0
    %746 = vmatpush1.bf16.msra.mxu0 %v723
    %747 = vmatprep.subr.bf16.mxu0 0
    %748 = vmatpush1.bf16.msra.mxu0 %v724
    %749 = vmatprep.subr.bf16.mxu0 0
    %750 = vmatpush1.bf16.msra.mxu0 0
    %751 = vmatprep.subr.bf16.mxu0 0
    %752 = vmatpush1.bf16.msra.mxu0 0
    %753 = vmatprep.subr.bf16.mxu0 0
    %754 = vmatpush1.bf16.msra.mxu0 0
    %755 = vmatprep.subr.bf16.mxu0 0
    %756 = vmatpush1.bf16.msra.mxu0 0
    %757 = vmatprep.subr.bf16.mxu0 0
    %758 = vmatpush1.bf16.msra.mxu0 0
    %759 = vmatprep.subr.bf16.mxu0 0
    %760 = vmatpush1.bf16.msra.mxu0 0
    %761 = vmatprep.subr.bf16.mxu0 0
    %762 = vmatpush1.bf16.msra.mxu0 0
    %763 = vmatprep.subr.bf16.mxu0 0
    %764 = vmatpush1.bf16.msra.mxu0 0
    %765 = vmatprep.mubr.bf16.mxu0 0
    %766 = vmatmul.mubr.bf16.gmra.mrb[0].mxu0 %v661
    %v767 = vpop.f32.mrb[0].mxu0
    %v768 = vadd.f32 %v683, %v767
    %v769 = vpop.f32.mrb[0].mxu0
    %v770 = vpop.f32.mrb[0].mxu0
    %v771 = vpop.f32.mrb[0].mxu0
    %772 = vdwg.mxu0
    %v773 = vlaneseq
    %v774 = vand.u32 %v773, 127
    %vm775 = vcmp.lt.s32.totalorder %v774, 32
    %v776 = vsel %vm775, 1, 0
    %vm777 = vcmp.eq.s32.totalorder %v776, 1
    %v778 = vsel %vm777, %v768, 0.0
    %779 = vadd.xlane.f32.xlu0 %v778
    %v780 = vpop.xlane.xlu0 %779
    %v781 = vmul.f32 %v780, 0.03125
    %v782 = vmul.f32 %v778, %v778
    %783 = vadd.xlane.f32.xlu0 %v782
    %v784 = vpop.xlane.xlu0 %783
    %v785 = vmul.f32 %v784, 0.03125
    %v786 = vmul.f32 %v781, %v781
    %v787 = vsub.f32 %v785, %v786
    %v788 = vmax.f32 %v787, 0.0
    %v789 = vsub.f32 %v768, %v781
    %v790 = vadd.f32 %v788, 1e-05
    %v791 = vrsqrt.pop %v790
    %v792 = vmul.f32 %v789, %v791
    %v793 = vld [vmem:[%s5] sm:$0x1]
    %v795 = vlaneseq
    %v796 = vshrl.u32 %v795, 7
    %v797 = vsub.s32 0, %v796
    %v798 = vrot.slane %v793, %v797
    %v800 = vmul.f32 %v792, %v798
    %v801 = vld [vmem:[%s6] sm:$0x1]
    %v803 = vlaneseq
    %v804 = vshrl.u32 %v803, 7
    %v805 = vsub.s32 0, %v804
    %v806 = vrot.slane %v801, %v805
    %v808 = vadd.f32 %v800, %v806
    %809 = vst [vmem:[#allocation8] sm:$0xff] %v808
    // Predicated region
    $region42: #{tpu_custom_call.1} parent=1 // pred_check
      _
    $region43: #{tpu_custom_call.1} parent=1 // pred_check_branch
      %811 = sbr.rel (0) target = $region45
    $region44: #{tpu_custom_call.1} parent=1 // pred_region
      %s813 = ssub.s32 128, 32
      %814 = vsyncadd [#allocation4], %s813
      %s815 = sshll.u32 [#allocation8], 4
      %s816 = int_to_ptr.vmem [resolvable:$true] %s815
      %821 = dma.vmem_to_hbm [thread:$0]  %s816, 32, %s7, [#allocation4], 32, 32, 2
    $region45: #{tpu_custom_call.1} parent=1 // pred_fallthru
      _
    // Predicated region
    $region46: #{tpu_custom_call.1} parent=1 // pred_check
      _
    $region47: #{tpu_custom_call.1} parent=1 // pred_check_branch
      %823 = sbr.rel (0) target = $region49
    $region48: #{tpu_custom_call.1} parent=1 // pred_region
      %824 = dma.done [#allocation4], 128
    $region49: #{tpu_custom_call.1} parent=1 // pred_fallthru
      _
    %825 = vsyncpa [#allocation3], 1
    %826 = vsyncpa [#allocation6], 1
    %827 = vsyncpa [#allocation4], 1

</llo_original>
